<compile_context>
chip_gen: v7x
topology: tpu7x:2x2x1
jax: 0.10.0
libtpu: 0.0.40
codegen_flags: <defaults>
</compile_context>

<pallas_src>
import jax
import jax.numpy as jnp
from jax import lax
from jax.experimental import pallas as pl
from jax.experimental.pallas import tpu as pltpu

LN_EPS = 1e-5


# ----------------------------------------------------------------------------
# Kernel 1: one-shot tiny FF producing the pre-fused per-batch modulation.
#   inputs are the transposed Linear weights (fan_in, fan_out):
#     gw1t (W, W), gw2t (W, H), bw1t (W, W), bw2t (W, H), ln_g/ln_b (1, H)
#   outputs: scale = gamma*ln_g, shift = gamma*ln_b + beta   (both (B, H) f32)
# ----------------------------------------------------------------------------
def ff_scale_shift_kernel(w_ref, gw1_ref, gw2_ref, bw1_ref, bw2_ref,
                          ln_g_ref, ln_b_ref, scale_ref, shift_ref):
    w = w_ref[...].astype(jnp.float32)                                   # (B, W)
    hg = jnp.maximum(
        jnp.dot(w, gw1_ref[...], preferred_element_type=jnp.float32), 0.0)
    hb = jnp.maximum(
        jnp.dot(w, bw1_ref[...], preferred_element_type=jnp.float32), 0.0)
    gamma = jnp.dot(hg, gw2_ref[...], preferred_element_type=jnp.float32)  # (B, H)
    beta = jnp.dot(hb, bw2_ref[...], preferred_element_type=jnp.float32)   # (B, H)

    ln_g = ln_g_ref[...].astype(jnp.float32)                             # (1, H)
    ln_b = ln_b_ref[...].astype(jnp.float32)
    # gamma*(ln*g + b) + beta == ln*(gamma*g) + (gamma*b + beta)
    scale_ref[...] = gamma * ln_g
    shift_ref[...] = gamma * ln_b + beta


# ----------------------------------------------------------------------------
# Kernel 2: steady-state modulated LayerNorm, gridded over (batch, seq tiles).
#   hidden block: (1, ts, H); scale/shift blocks: (1, 1, H)
# ----------------------------------------------------------------------------
def sln_mod_kernel(hidden_ref, scale_ref, shift_ref, out_ref):
    x = hidden_ref[0].astype(jnp.float32)            # (ts, H) -- stats in f32

    # Single-pass LayerNorm statistics (biased variance, eps inside rsqrt).
    inv_h = jnp.float32(1.0 / x.shape[-1])
    s = jnp.sum(x, axis=-1, keepdims=True)
    ss = jnp.sum(x * x, axis=-1, keepdims=True)
    mean = s * inv_h
    var = ss * inv_h - mean * mean
    ln = (x - mean) * lax.rsqrt(var + LN_EPS)

    scale = scale_ref[0].astype(jnp.float32)         # (1, H)
    shift = shift_ref[0].astype(jnp.float32)         # (1, H)
    out_ref[0] = (ln * scale + shift).astype(out_ref.dtype)


# ----------------------------------------------------------------------------
# Wrapper
# ----------------------------------------------------------------------------
def sln_forward(hidden, w, params, *, seq_tile=4096):
    gw1, gw2, bw1, bw2, ln_g, ln_b = params
    B, S, H = hidden.shape

    # --- per-batch modulation vectors (tiny one-shot call) -------------------
    vmem = pl.BlockSpec(memory_space=pltpu.MemorySpace.VMEM)
    scale, shift = pl.pallas_call(
        ff_scale_shift_kernel,
        out_shape=(jax.ShapeDtypeStruct((B, H), jnp.float32),
                   jax.ShapeDtypeStruct((B, H), jnp.float32)),
        in_specs=[vmem] * 7,
        out_specs=(vmem, vmem),
    )(w, gw1.T, gw2.T, bw1.T, bw2.T,
      ln_g.reshape(1, H), ln_b.reshape(1, H))

    scale3 = scale.reshape(B, 1, H)
    shift3 = shift.reshape(B, 1, H)

    # --- sequence tile sizing -------------------------------------------------
    # VMEM footprint per row of the tile:
    #   2x double-buffered input + 2x double-buffered output (hidden dtype)
    #   + ~3 block-sized f32 temporaries inside the body.
    itemsize = hidden.dtype.itemsize
    sublane = max(8, 32 // itemsize)           # 8 f32 / 16 bf16 / 32 int8
    per_row_bytes = H * (4 * itemsize + 12)
    vmem_budget = 20 * 1024 * 1024             # leaves headroom under 32 MiB
    max_ts = max(sublane, vmem_budget // per_row_bytes)

    ts = int(min(seq_tile, S, max_ts))
    if ts < S:                                 # (8,128)-rule: multiple of sublane
        ts = max(sublane, (ts // sublane) * sublane)

    # Keep enough grid steps for megacore sharding / pipeline ramp, but never
    # shrink below ~256 rows (per-step overhead starts to show below that).
    min_ts = min(S, max(sublane, 256))
    def _steps(t):
        return B * ((S + t - 1) // t)
    while ts > min_ts and _steps(ts) < 8:
        nts = max(min_ts, ((ts // 2) // sublane) * sublane)
        if nts >= ts:
            break
        ts = nts

    grid = (B, pl.cdiv(S, ts))

    return pl.pallas_call(
        sln_mod_kernel,
        out_shape=jax.ShapeDtypeStruct((B, S, H), hidden.dtype),
        grid_spec=pltpu.PrefetchScalarGridSpec(
            num_scalar_prefetch=0,
            grid=grid,
            in_specs=[
                pl.BlockSpec((1, ts, H), lambda b, s: (b, s, 0)),   # hidden
                pl.BlockSpec((1, 1, H), lambda b, s: (b, 0, 0)),    # scale
                pl.BlockSpec((1, 1, H), lambda b, s: (b, 0, 0)),    # shift
            ],
            out_specs=pl.BlockSpec((1, ts, H), lambda b, s: (b, s, 0)),
        ),
        compiler_params=pltpu.CompilerParams(
            dimension_semantics=("parallel", "parallel"),
            vmem_limit_bytes=32 * 1024 * 1024,
        ),
    )(hidden, scale3, shift3)


# ----------------------------------------------------------------------------
# Parameter init mimicking PyTorch nn.Linear / nn.LayerNorm defaults
# ----------------------------------------------------------------------------
def make_params(key, w_dim, h_size):
    k1, k2, k3, k4 = jax.random.split(key, 4)

    def lin_weight(k, fan_in, fan_out):
        # torch.nn.Linear: weight (out, in) ~ U(-1/sqrt(fan_in), 1/sqrt(fan_in))
        bound = 1.0 / float(fan_in) ** 0.5
        return jax.random.uniform(k, (fan_out, fan_in), jnp.float32, -bound, bound)

    gw1 = lin_weight(k1, w_dim, w_dim)    # gamma.ff1 (hidden_channel = w_dim)
    gw2 = lin_weight(k2, w_dim, h_size)   # gamma.ff2
    bw1 = lin_weight(k3, w_dim, w_dim)    # beta.ff1
    bw2 = lin_weight(k4, w_dim, h_size)   # beta.ff2
    ln_g = jnp.ones((1, h_size), jnp.float32)   # nn.LayerNorm defaults
    ln_b = jnp.zeros((1, h_size), jnp.float32)
    return gw1, gw2, bw1, bw2, ln_g, ln_b


def sln_reference(hidden, w, params):
    """Pure-JAX reference for correctness check."""
    gw1, gw2, bw1, bw2, ln_g, ln_b = params
    gamma = jnp.maximum(w @ gw1.T, 0.0) @ gw2.T
    beta = jnp.maximum(w @ bw1.T, 0.0) @ bw2.T
    mean = jnp.mean(hidden, axis=-1, keepdims=True)
    var = jnp.mean((hidden - mean) ** 2, axis=-1, keepdims=True)
    ln = (hidden - mean) / jnp.sqrt(var + LN_EPS)
    ln = ln * ln_g[0] + ln_b[0]
    return gamma[:, None, :] * ln + beta[:, None, :]


if __name__ == "__main__":
    key = jax.random.PRNGKey(0)
    # batch=2, seq=16, h_size=128 (lane-dense feature dim), w_dim=16
    B, S, H, W = 2, 16, 128, 16
    kh, kw, kp = jax.random.split(key, 3)
    hidden = jax.random.normal(kh, (B, S, H), dtype=jnp.float32)
    w_vec = jax.random.normal(kw, (B, W), dtype=jnp.float32)
    params = make_params(kp, W, H)

    out = sln_forward(hidden, w_vec, params)
    jax.block_until_ready(out)

    ref = sln_reference(hidden, w_vec, params)
    assert out.shape == (B, S, H)
    assert jnp.allclose(out, ref, atol=1e-4, rtol=1e-4), "mismatch vs reference"

    print("KERNEL_OK")
</pallas_src>

<mosaic_0001>
module attributes {stable_mosaic.version = 11 : i64} {
  func.func @ff_scale_shift_kernel(%arg0: memref<2x16xf32, #tpu.memory_space<vmem>>, %arg1: memref<16x16xf32, #tpu.memory_space<vmem>>, %arg2: memref<16x128xf32, #tpu.memory_space<vmem>>, %arg3: memref<16x16xf32, #tpu.memory_space<vmem>>, %arg4: memref<16x128xf32, #tpu.memory_space<vmem>>, %arg5: memref<1x128xf32, #tpu.memory_space<vmem>>, %arg6: memref<1x128xf32, #tpu.memory_space<vmem>>, %arg7: memref<2x128xf32, #tpu.memory_space<vmem>>, %arg8: memref<2x128xf32, #tpu.memory_space<vmem>>) attributes {dimension_semantics = [], scalar_prefetch = 0 : i64, scratch_operands = 0 : i64, tpu.core_type = #tpu.core_type<tc>} {
    %c0 = arith.constant 0 : index
    %c0_0 = arith.constant 0 : index
    %0 = vector.load %arg0[%c0, %c0_0] : memref<2x16xf32, #tpu.memory_space<vmem>>, vector<2x16xf32>
    %c0_1 = arith.constant 0 : index
    %c0_2 = arith.constant 0 : index
    %1 = vector.load %arg1[%c0_1, %c0_2] : memref<16x16xf32, #tpu.memory_space<vmem>>, vector<16x16xf32>
    %cst = arith.constant dense<0.000000e+00> : vector<2x16xf32>
    %2 = tpu.matmul %0, %1, %cst {dimension_numbers = #tpu.dot_dimension_numbers<[1], [0], [0], [1], [0, 0, 1, 1], [], []>} : vector<2x16xf32>, vector<16x16xf32>, vector<2x16xf32> -> vector<2x16xf32>
    %cst_3 = arith.constant 0.000000e+00 : f32
    %3 = vector.broadcast %cst_3 : f32 to vector<2x16xf32>
    %4 = arith.maximumf %2, %3 : vector<2x16xf32>
    %c0_4 = arith.constant 0 : index
    %c0_5 = arith.constant 0 : index
    %5 = vector.load %arg3[%c0_4, %c0_5] : memref<16x16xf32, #tpu.memory_space<vmem>>, vector<16x16xf32>
    %cst_6 = arith.constant dense<0.000000e+00> : vector<2x16xf32>
    %6 = tpu.matmul %0, %5, %cst_6 {dimension_numbers = #tpu.dot_dimension_numbers<[1], [0], [0], [1], [0, 0, 1, 1], [], []>} : vector<2x16xf32>, vector<16x16xf32>, vector<2x16xf32> -> vector<2x16xf32>
    %cst_7 = arith.constant 0.000000e+00 : f32
    %7 = vector.broadcast %cst_7 : f32 to vector<2x16xf32>
    %8 = arith.maximumf %6, %7 : vector<2x16xf32>
    %c0_8 = arith.constant 0 : index
    %c0_9 = arith.constant 0 : index
    %9 = vector.load %arg2[%c0_8, %c0_9] : memref<16x128xf32, #tpu.memory_space<vmem>>, vector<16x128xf32>
    %cst_10 = arith.constant dense<0.000000e+00> : vector<2x128xf32>
    %10 = tpu.matmul %4, %9, %cst_10 {dimension_numbers = #tpu.dot_dimension_numbers<[1], [0], [0], [1], [0, 0, 1, 1], [], []>} : vector<2x16xf32>, vector<16x128xf32>, vector<2x128xf32> -> vector<2x128xf32>
    %c0_11 = arith.constant 0 : index
    %c0_12 = arith.constant 0 : index
    %11 = vector.load %arg4[%c0_11, %c0_12] : memref<16x128xf32, #tpu.memory_space<vmem>>, vector<16x128xf32>
    %cst_13 = arith.constant dense<0.000000e+00> : vector<2x128xf32>
    %12 = tpu.matmul %8, %11, %cst_13 {dimension_numbers = #tpu.dot_dimension_numbers<[1], [0], [0], [1], [0, 0, 1, 1], [], []>} : vector<2x16xf32>, vector<16x128xf32>, vector<2x128xf32> -> vector<2x128xf32>
    %c0_14 = arith.constant 0 : index
    %c0_15 = arith.constant 0 : index
    %13 = vector.load %arg5[%c0_14, %c0_15] : memref<1x128xf32, #tpu.memory_space<vmem>>, vector<1x128xf32>
    %c0_16 = arith.constant 0 : index
    %c0_17 = arith.constant 0 : index
    %14 = vector.load %arg6[%c0_16, %c0_17] : memref<1x128xf32, #tpu.memory_space<vmem>>, vector<1x128xf32>
    %15 = vector.broadcast %13 : vector<1x128xf32> to vector<2x128xf32>
    %16 = arith.mulf %10, %15 : vector<2x128xf32>
    %c0_18 = arith.constant 0 : index
    %c0_19 = arith.constant 0 : index
    %17 = vector.load %arg7[%c0_18, %c0_19] : memref<2x128xf32, #tpu.memory_space<vmem>>, vector<2x128xf32>
    tpu.vector_store %arg7[%c0_18, %c0_19], %16 {strides = array<i32>} : memref<2x128xf32, #tpu.memory_space<vmem>>, vector<2x128xf32>,
    %18 = vector.broadcast %14 : vector<1x128xf32> to vector<2x128xf32>
    %19 = arith.mulf %10, %18 : vector<2x128xf32>
    %20 = arith.addf %19, %12 : vector<2x128xf32>
    %c0_20 = arith.constant 0 : index
    %c0_21 = arith.constant 0 : index
    %21 = vector.load %arg8[%c0_20, %c0_21] : memref<2x128xf32, #tpu.memory_space<vmem>>, vector<2x128xf32>
    tpu.vector_store %arg8[%c0_20, %c0_21], %20 {strides = array<i32>} : memref<2x128xf32, #tpu.memory_space<vmem>>, vector<2x128xf32>,
    return
  }
}

</mosaic_0001>

<llo_original>
// kernel: tpu_custom_call.1
$region0: #{tpu_custom_call.1}
  #allocation0 [shape = 'u32[]', space=smem, size = 0x4, offset = 0x4, fixed_abs, tag = 'smem constant byte address 0x4 - core index']
  #allocation1 [shape = 'u32[144,128]{1,0:T(1,128)}', space=vmem, size = 0x12000, scoped, tag = 'internal scratch']
  %s0 = inlined_call_operand.hbm [shape: f32[2,16], index: 0, kind: input, shape index: {}]
  %s1 = inlined_call_operand.hbm [shape: f32[16,16], index: 1, kind: input, shape index: {}]
  %s2 = inlined_call_operand.hbm [shape: f32[16,128], index: 2, kind: input, shape index: {}]
  %s3 = inlined_call_operand.hbm [shape: f32[16,16], index: 3, kind: input, shape index: {}]
  %s4 = inlined_call_operand.hbm [shape: f32[16,128], index: 4, kind: input, shape index: {}]
  %s5 = inlined_call_operand.vmem [shape: f32[1,128], index: 5, kind: input, shape index: {}]
  %s6 = inlined_call_operand.vmem [shape: f32[1,128], index: 6, kind: input, shape index: {}]
  %s7 = inlined_call_operand.hbm [shape: f32[2,128], index: 7, kind: output, shape index: {0}]
  %s8 = inlined_call_operand.hbm [shape: f32[2,128], index: 8, kind: output, shape index: {1}]
  %9 = xla_tuple %s7, %s8
  %s10 = sld [smem:[#allocation0]]
  $region66: #{tpu_custom_call.1} parent=0
    _
  %s12 = ssub.s32 1, %s10
  %s13 = scalar_select 0, %s12, %s10
  $region1: #{tpu_custom_call.1} parent=0
    #allocation2 [shape = 'u8[1024]{0}', space=vmem, size = 0x400, scoped, tag = 'input window, operand 0, single buffered']
    #allocation3 [shape = 's32[1]{0}', space=sflag, size = 0x4, scoped, tag = 'scoped memory for tpu_custom_call.1']
    #allocation4 [shape = 's32[1]{0}', space=sflag, size = 0x4, scoped, tag = 'scoped memory for tpu_custom_call.1']
    #allocation5 [shape = 'u8[8192]{0}', space=vmem, size = 0x2000, scoped, tag = 'input window, operand 1, single buffered']
    #allocation6 [shape = 's32[1]{0}', space=sflag, size = 0x4, scoped, tag = 'scoped memory for tpu_custom_call.1']
    #allocation7 [shape = 'u8[8192]{0}', space=vmem, size = 0x2000, scoped, tag = 'input window, operand 2, single buffered']
    #allocation8 [shape = 'u8[8192]{0}', space=vmem, size = 0x2000, scoped, tag = 'input window, operand 3, single buffered']
    #allocation9 [shape = 's32[1]{0}', space=sflag, size = 0x4, scoped, tag = 'scoped memory for tpu_custom_call.1']
    #allocation10 [shape = 'u8[8192]{0}', space=vmem, size = 0x2000, scoped, tag = 'input window, operand 4, single buffered']
    #allocation11 [shape = 'u8[1024]{0}', space=vmem, size = 0x400, scoped, tag = 'output window, operand 0, single buffered']
    #allocation12 [shape = 'u8[1024]{0}', space=vmem, size = 0x400, scoped, tag = 'output window, operand 1, single buffered']
    #allocation13 [shape = 's32[1]{0}', space=sflag, size = 0x4, scoped, tag = 'scoped memory for tpu_custom_call.1']
    %14 = vsyncpa [#allocation3], 0
    %15 = vsyncpa [#allocation6], 0
    %16 = vsyncpa [#allocation9], 0
    %17 = vsyncpa [#allocation4], 0
    %18 = vsyncpa [#allocation13], 0
    // Predicated region
    $region2: #{tpu_custom_call.1} parent=1 // pred_check
      _
    $region3: #{tpu_custom_call.1} parent=1 // pred_check_branch
      %20 = sbr.rel (0) target = $region5
    $region4: #{tpu_custom_call.1} parent=1 // pred_region
      %s22 = ssub.s32 32, 32
      %23 = vsyncadd [#allocation3], %s22
      %s25 = sshll.u32 [#allocation2], 4
      %s26 = int_to_ptr.vmem [resolvable:$true] %s25
      %28 = dma.hbm_to_vmem [thread:$0]  %s0, 32, %s26, [#allocation3]
    $region5: #{tpu_custom_call.1} parent=1 // pred_fallthru
      _
    // Predicated region
    $region6: #{tpu_custom_call.1} parent=1 // pred_check
      _
    $region7: #{tpu_custom_call.1} parent=1 // pred_check_branch
      %30 = sbr.rel (0) target = $region9
    $region8: #{tpu_custom_call.1} parent=1 // pred_region
      %s32 = ssub.s32 256, 256
      %33 = vsyncadd [#allocation6], %s32
      %s34 = sshll.u32 [#allocation5], 4
      %s35 = int_to_ptr.vmem [resolvable:$true] %s34
      %40 = dma.hbm_to_vmem [thread:$0]  %s1, 256, %s35, [#allocation6], 128, 128, 8
    $region9: #{tpu_custom_call.1} parent=1 // pred_fallthru
      _
    // Predicated region
    $region10: #{tpu_custom_call.1} parent=1 // pred_check
      _
    $region11: #{tpu_custom_call.1} parent=1 // pred_check_branch
      %42 = sbr.rel (0) target = $region13
    $region12: #{tpu_custom_call.1} parent=1 // pred_region
      %s44 = ssub.s32 256, 256
      %45 = vsyncadd [#allocation6], %s44
      %s46 = sshll.u32 [#allocation7], 4
      %s47 = int_to_ptr.vmem [resolvable:$true] %s46
      %52 = dma.hbm_to_vmem [thread:$0]  %s2, 256, %s47, [#allocation6], 128, 128, 8
    $region13: #{tpu_custom_call.1} parent=1 // pred_fallthru
      _
    // Predicated region
    $region14: #{tpu_custom_call.1} parent=1 // pred_check
      _
    $region15: #{tpu_custom_call.1} parent=1 // pred_check_branch
      %54 = sbr.rel (0) target = $region17
    $region16: #{tpu_custom_call.1} parent=1 // pred_region
      %s56 = ssub.s32 256, 256
      %57 = vsyncadd [#allocation9], %s56
      %s58 = sshll.u32 [#allocation8], 4
      %s59 = int_to_ptr.vmem [resolvable:$true] %s58
      %64 = dma.hbm_to_vmem [thread:$0]  %s3, 256, %s59, [#allocation9], 128, 128, 8
    $region17: #{tpu_custom_call.1} parent=1 // pred_fallthru
      _
    // Predicated region
    $region18: #{tpu_custom_call.1} parent=1 // pred_check
      _
    $region19: #{tpu_custom_call.1} parent=1 // pred_check_branch
      %66 = sbr.rel (0) target = $region21
    $region20: #{tpu_custom_call.1} parent=1 // pred_region
      %s68 = ssub.s32 256, 256
      %69 = vsyncadd [#allocation9], %s68
      %s70 = sshll.u32 [#allocation10], 4
      %s71 = int_to_ptr.vmem [resolvable:$true] %s70
      %76 = dma.hbm_to_vmem [thread:$0]  %s4, 256, %s71, [#allocation9], 128, 128, 8
    $region21: #{tpu_custom_call.1} parent=1 // pred_fallthru
      _
    // Predicated region
    $region22: #{tpu_custom_call.1} parent=1 // pred_check
      _
    $region23: #{tpu_custom_call.1} parent=1 // pred_check_branch
      %78 = sbr.rel (0) target = $region25
    $region24: #{tpu_custom_call.1} parent=1 // pred_region
      _
    $region25: #{tpu_custom_call.1} parent=1 // pred_fallthru
      _
    // Predicated region
    $region26: #{tpu_custom_call.1} parent=1 // pred_check
      _
    $region27: #{tpu_custom_call.1} parent=1 // pred_check_branch
      %80 = sbr.rel (0) target = $region29
    $region28: #{tpu_custom_call.1} parent=1 // pred_region
      _
    $region29: #{tpu_custom_call.1} parent=1 // pred_fallthru
      _
    // Predicated region
    $region30: #{tpu_custom_call.1} parent=1 // pred_check
      _
    $region31: #{tpu_custom_call.1} parent=1 // pred_check_branch
      %82 = sbr.rel (0) target = $region33
    $region32: #{tpu_custom_call.1} parent=1 // pred_region
      %83 = dma.done [#allocation3], 32
    $region33: #{tpu_custom_call.1} parent=1 // pred_fallthru
      _
    // Predicated region
    $region34: #{tpu_custom_call.1} parent=1 // pred_check
      _
    $region35: #{tpu_custom_call.1} parent=1 // pred_check_branch
      %85 = sbr.rel (0) target = $region37
    $region36: #{tpu_custom_call.1} parent=1 // pred_region
      %86 = dma.done [#allocation6], 256
    $region37: #{tpu_custom_call.1} parent=1 // pred_fallthru
      _
    // Predicated region
    $region38: #{tpu_custom_call.1} parent=1 // pred_check
      _
    $region39: #{tpu_custom_call.1} parent=1 // pred_check_branch
      %88 = sbr.rel (0) target = $region41
    $region40: #{tpu_custom_call.1} parent=1 // pred_region
      %89 = dma.done [#allocation6], 256
    $region41: #{tpu_custom_call.1} parent=1 // pred_fallthru
      _
    // Predicated region
    $region42: #{tpu_custom_call.1} parent=1 // pred_check
      _
    $region43: #{tpu_custom_call.1} parent=1 // pred_check_branch
      %91 = sbr.rel (0) target = $region45
    $region44: #{tpu_custom_call.1} parent=1 // pred_region
      %92 = dma.done [#allocation9], 256
    $region45: #{tpu_custom_call.1} parent=1 // pred_fallthru
      _
    // Predicated region
    $region46: #{tpu_custom_call.1} parent=1 // pred_check
      _
    $region47: #{tpu_custom_call.1} parent=1 // pred_check_branch
      %94 = sbr.rel (0) target = $region49
    $region48: #{tpu_custom_call.1} parent=1 // pred_region
      %95 = dma.done [#allocation9], 256
    $region49: #{tpu_custom_call.1} parent=1 // pred_fallthru
      _
    %v96 = vld [vmem:[#allocation2] sm:$0x3]
    %v97 = vld [vmem:[#allocation5] sm:$0xff]
    %v98 = vld [vmem:[#allocation5 + $0x8] sm:$0xff]
    %vm99 = vcmask 130048
    %v101 = vsel %vm99, %v96, 0
    %103 = vmatprep.subr.mxu0 0.0
    %104 = vmatpush1.msra.mxu0 %v97
    %105 = vmatprep.subr.mxu0 0.0
    %106 = vmatpush1.msra.mxu0 %v98
    %107 = vmatprep.subr.mxu0 0.0
    %108 = vmatpush1.msra.mxu0 0.0
    %109 = vmatprep.subr.mxu0 0.0
    %110 = vmatpush1.msra.mxu0 0.0
    %111 = vmatprep.subr.mxu0 0.0
    %112 = vmatpush1.msra.mxu0 0.0
    %113 = vmatprep.subr.mxu0 0.0
    %114 = vmatpush1.msra.mxu0 0.0
    %115 = vmatprep.subr.mxu0 0.0
    %116 = vmatpush1.msra.mxu0 0.0
    %117 = vmatprep.subr.mxu0 0.0
    %118 = vmatpush1.msra.mxu0 0.0
    %119 = vmatprep.subr.mxu0 0.0
    %120 = vmatpush1.msra.mxu0 0.0
    %121 = vmatprep.subr.mxu0 0.0
    %122 = vmatpush1.msra.mxu0 0.0
    %123 = vmatprep.subr.mxu0 0.0
    %124 = vmatpush1.msra.mxu0 0.0
    %125 = vmatprep.subr.mxu0 0.0
    %126 = vmatpush1.msra.mxu0 0.0
    %127 = vmatprep.subr.mxu0 0.0
    %128 = vmatpush1.msra.mxu0 0.0
    %129 = vmatprep.subr.mxu0 0.0
    %130 = vmatpush1.msra.mxu0 0.0
    %131 = vmatprep.subr.mxu0 0.0
    %132 = vmatpush1.msra.mxu0 0.0
    %133 = vmatprep.subr.mxu0 0.0
    %134 = vmatpush1.msra.mxu0 0.0
    %135 = vmatprep.subr.mxu0 0.0
    %136 = vmatpush1.msra.mxu0 0.0
    %137 = vmatprep.subr.mxu0 0.0
    %138 = vmatpush1.msra.mxu0 0.0
    %139 = vmatprep.subr.mxu0 0.0
    %140 = vmatpush1.msra.mxu0 0.0
    %141 = vmatprep.subr.mxu0 0.0
    %142 = vmatpush1.msra.mxu0 0.0
    %143 = vmatprep.subr.mxu0 0.0
    %144 = vmatpush1.msra.mxu0 0.0
    %145 = vmatprep.subr.mxu0 0.0
    %146 = vmatpush1.msra.mxu0 0.0
    %147 = vmatprep.subr.mxu0 0.0
    %148 = vmatpush1.msra.mxu0 0.0
    %149 = vmatprep.subr.mxu0 0.0
    %150 = vmatpush1.msra.mxu0 0.0
    %151 = vmatprep.subr.mxu0 0.0
    %152 = vmatpush1.msra.mxu0 0.0
    %153 = vmatprep.subr.mxu0 0.0
    %154 = vmatpush1.msra.mxu0 0.0
    %155 = vmatprep.subr.mxu0 0.0
    %156 = vmatpush1.msra.mxu0 0.0
    %157 = vmatprep.subr.mxu0 0.0
    %158 = vmatpush1.msra.mxu0 0.0
    %159 = vmatprep.subr.mxu0 0.0
    %160 = vmatpush1.msra.mxu0 0.0
    %161 = vmatprep.subr.mxu0 0.0
    %162 = vmatpush1.msra.mxu0 0.0
    %163 = vmatprep.subr.mxu0 0.0
    %164 = vmatpush1.msra.mxu0 0.0
    %165 = vmatprep.subr.mxu0 0.0
    %166 = vmatpush1.msra.mxu0 0.0
    %167 = vmatprep.mubr.f32.mxu0 0.0
    %168 = vmatmul.mubr.f32.gmra.mrb[0].mxu0 %v101
    %v169 = vpop.f32.mrb[0].mxu0
    %v170 = vadd.f32 0.0, %v169
    %v171 = vpop.f32.mrb[0].mxu0
    %172 = vdwg.mxu0
    %v173 = vmax.f32 %v170, 0.0
    %v174 = vld [vmem:[#allocation8] sm:$0xff]
    %v175 = vld [vmem:[#allocation8 + $0x8] sm:$0xff]
    %176 = vmatprep.subr.mxu0 0.0
    %177 = vmatpush1.msra.mxu0 %v174
    %178 = vmatprep.subr.mxu0 0.0
    %179 = vmatpush1.msra.mxu0 %v175
    %180 = vmatprep.subr.mxu0 0.0
    %181 = vmatpush1.msra.mxu0 0.0
    %182 = vmatprep.subr.mxu0 0.0
    %183 = vmatpush1.msra.mxu0 0.0
    %184 = vmatprep.subr.mxu0 0.0
    %185 = vmatpush1.msra.mxu0 0.0
    %186 = vmatprep.subr.mxu0 0.0
    %187 = vmatpush1.msra.mxu0 0.0
    %188 = vmatprep.subr.mxu0 0.0
    %189 = vmatpush1.msra.mxu0 0.0
    %190 = vmatprep.subr.mxu0 0.0
    %191 = vmatpush1.msra.mxu0 0.0
    %192 = vmatprep.subr.mxu0 0.0
    %193 = vmatpush1.msra.mxu0 0.0
    %194 = vmatprep.subr.mxu0 0.0
    %195 = vmatpush1.msra.mxu0 0.0
    %196 = vmatprep.subr.mxu0 0.0
    %197 = vmatpush1.msra.mxu0 0.0
    %198 = vmatprep.subr.mxu0 0.0
    %199 = vmatpush1.msra.mxu0 0.0
    %200 = vmatprep.subr.mxu0 0.0
    %201 = vmatpush1.msra.mxu0 0.0
    %202 = vmatprep.subr.mxu0 0.0
    %203 = vmatpush1.msra.mxu0 0.0
    %204 = vmatprep.subr.mxu0 0.0
    %205 = vmatpush1.msra.mxu0 0.0
    %206 = vmatprep.subr.mxu0 0.0
    %207 = vmatpush1.msra.mxu0 0.0
    %208 = vmatprep.subr.mxu0 0.0
    %209 = vmatpush1.msra.mxu0 0.0
    %210 = vmatprep.subr.mxu0 0.0
    %211 = vmatpush1.msra.mxu0 0.0
    %212 = vmatprep.subr.mxu0 0.0
    %213 = vmatpush1.msra.mxu0 0.0
    %214 = vmatprep.subr.mxu0 0.0
    %215 = vmatpush1.msra.mxu0 0.0
    %216 = vmatprep.subr.mxu0 0.0
    %217 = vmatpush1.msra.mxu0 0.0
    %218 = vmatprep.subr.mxu0 0.0
    %219 = vmatpush1.msra.mxu0 0.0
    %220 = vmatprep.subr.mxu0 0.0
    %221 = vmatpush1.msra.mxu0 0.0
    %222 = vmatprep.subr.mxu0 0.0
    %223 = vmatpush1.msra.mxu0 0.0
    %224 = vmatprep.subr.mxu0 0.0
    %225 = vmatpush1.msra.mxu0 0.0
    %226 = vmatprep.subr.mxu0 0.0
    %227 = vmatpush1.msra.mxu0 0.0
    %228 = vmatprep.subr.mxu0 0.0
    %229 = vmatpush1.msra.mxu0 0.0
    %230 = vmatprep.subr.mxu0 0.0
    %231 = vmatpush1.msra.mxu0 0.0
    %232 = vmatprep.subr.mxu0 0.0
    %233 = vmatpush1.msra.mxu0 0.0
    %234 = vmatprep.subr.mxu0 0.0
    %235 = vmatpush1.msra.mxu0 0.0
    %236 = vmatprep.subr.mxu0 0.0
    %237 = vmatpush1.msra.mxu0 0.0
    %238 = vmatprep.subr.mxu0 0.0
    %239 = vmatpush1.msra.mxu0 0.0
    %240 = vmatprep.mubr.f32.mxu0 0.0
    %241 = vmatmul.mubr.f32.gmra.mrb[0].mxu0 %v101
    %v242 = vpop.f32.mrb[0].mxu0
    %v243 = vadd.f32 0.0, %v242
    %v244 = vpop.f32.mrb[0].mxu0
    %245 = vdwg.mxu0
    %v246 = vmax.f32 %v243, 0.0
    %v247 = vld [vmem:[#allocation7] sm:$0xff]
    %v248 = vld [vmem:[#allocation7 + $0x8] sm:$0xff]
    %v250 = vsel %vm99, %v173, 0
    %252 = vmatprep.subr.mxu0 0.0
    %253 = vmatpush1.msra.mxu0 %v247
    %254 = vmatprep.subr.mxu0 0.0
    %255 = vmatpush1.msra.mxu0 %v248
    %256 = vmatprep.subr.mxu0 0.0
    %257 = vmatpush1.msra.mxu0 0.0
    %258 = vmatprep.subr.mxu0 0.0
    %259 = vmatpush1.msra.mxu0 0.0
    %260 = vmatprep.subr.mxu0 0.0
    %261 = vmatpush1.msra.mxu0 0.0
    %262 = vmatprep.subr.mxu0 0.0
    %263 = vmatpush1.msra.mxu0 0.0
    %264 = vmatprep.subr.mxu0 0.0
    %265 = vmatpush1.msra.mxu0 0.0
    %266 = vmatprep.subr.mxu0 0.0
    %267 = vmatpush1.msra.mxu0 0.0
    %268 = vmatprep.subr.mxu0 0.0
    %269 = vmatpush1.msra.mxu0 0.0
    %270 = vmatprep.subr.mxu0 0.0
    %271 = vmatpush1.msra.mxu0 0.0
    %272 = vmatprep.subr.mxu0 0.0
    %273 = vmatpush1.msra.mxu0 0.0
    %274 = vmatprep.subr.mxu0 0.0
    %275 = vmatpush1.msra.mxu0 0.0
    %276 = vmatprep.subr.mxu0 0.0
    %277 = vmatpush1.msra.mxu0 0.0
    %278 = vmatprep.subr.mxu0 0.0
    %279 = vmatpush1.msra.mxu0 0.0
    %280 = vmatprep.subr.mxu0 0.0
    %281 = vmatpush1.msra.mxu0 0.0
    %282 = vmatprep.subr.mxu0 0.0
    %283 = vmatpush1.msra.mxu0 0.0
    %284 = vmatprep.subr.mxu0 0.0
    %285 = vmatpush1.msra.mxu0 0.0
    %286 = vmatprep.subr.mxu0 0.0
    %287 = vmatpush1.msra.mxu0 0.0
    %288 = vmatprep.subr.mxu0 0.0
    %289 = vmatpush1.msra.mxu0 0.0
    %290 = vmatprep.subr.mxu0 0.0
    %291 = vmatpush1.msra.mxu0 0.0
    %292 = vmatprep.subr.mxu0 0.0
    %293 = vmatpush1.msra.mxu0 0.0
    %294 = vmatprep.subr.mxu0 0.0
    %295 = vmatpush1.msra.mxu0 0.0
    %296 = vmatprep.subr.mxu0 0.0
    %297 = vmatpush1.msra.mxu0 0.0
    %298 = vmatprep.subr.mxu0 0.0
    %299 = vmatpush1.msra.mxu0 0.0
    %300 = vmatprep.subr.mxu0 0.0
    %301 = vmatpush1.msra.mxu0 0.0
    %302 = vmatprep.subr.mxu0 0.0
    %303 = vmatpush1.msra.mxu0 0.0
    %304 = vmatprep.subr.mxu0 0.0
    %305 = vmatpush1.msra.mxu0 0.0
    %306 = vmatprep.subr.mxu0 0.0
    %307 = vmatpush1.msra.mxu0 0.0
    %308 = vmatprep.subr.mxu0 0.0
    %309 = vmatpush1.msra.mxu0 0.0
    %310 = vmatprep.subr.mxu0 0.0
    %311 = vmatpush1.msra.mxu0 0.0
    %312 = vmatprep.subr.mxu0 0.0
    %313 = vmatpush1.msra.mxu0 0.0
    %314 = vmatprep.subr.mxu0 0.0
    %315 = vmatpush1.msra.mxu0 0.0
    %316 = vmatprep.mubr.f32.mxu0 0.0
    %317 = vmatmul.mubr.f32.gmra.mrb[0].mxu0 %v250
    %v318 = vpop.f32.mrb[0].mxu0
    %v319 = vadd.f32 0.0, %v318
    %v320 = vpop.f32.mrb[0].mxu0
    %321 = vdwg.mxu0
    %v322 = vld [vmem:[#allocation10] sm:$0xff]
    %v323 = vld [vmem:[#allocation10 + $0x8] sm:$0xff]
    %v325 = vsel %vm99, %v246, 0
    %327 = vmatprep.subr.mxu0 0.0
    %328 = vmatpush1.msra.mxu0 %v322
    %329 = vmatprep.subr.mxu0 0.0
    %330 = vmatpush1.msra.mxu0 %v323
    %331 = vmatprep.subr.mxu0 0.0
    %332 = vmatpush1.msra.mxu0 0.0
    %333 = vmatprep.subr.mxu0 0.0
    %334 = vmatpush1.msra.mxu0 0.0
    %335 = vmatprep.subr.mxu0 0.0
    %336 = vmatpush1.msra.mxu0 0.0
    %337 = vmatprep.subr.mxu0 0.0
    %338 = vmatpush1.msra.mxu0 0.0
    %339 = vmatprep.subr.mxu0 0.0
    %340 = vmatpush1.msra.mxu0 0.0
    %341 = vmatprep.subr.mxu0 0.0
    %342 = vmatpush1.msra.mxu0 0.0
    %343 = vmatprep.subr.mxu0 0.0
    %344 = vmatpush1.msra.mxu0 0.0
    %345 = vmatprep.subr.mxu0 0.0
    %346 = vmatpush1.msra.mxu0 0.0
    %347 = vmatprep.subr.mxu0 0.0
    %348 = vmatpush1.msra.mxu0 0.0
    %349 = vmatprep.subr.mxu0 0.0
    %350 = vmatpush1.msra.mxu0 0.0
    %351 = vmatprep.subr.mxu0 0.0
    %352 = vmatpush1.msra.mxu0 0.0
    %353 = vmatprep.subr.mxu0 0.0
    %354 = vmatpush1.msra.mxu0 0.0
    %355 = vmatprep.subr.mxu0 0.0
    %356 = vmatpush1.msra.mxu0 0.0
    %357 = vmatprep.subr.mxu0 0.0
    %358 = vmatpush1.msra.mxu0 0.0
    %359 = vmatprep.subr.mxu0 0.0
    %360 = vmatpush1.msra.mxu0 0.0
    %361 = vmatprep.subr.mxu0 0.0
    %362 = vmatpush1.msra.mxu0 0.0
    %363 = vmatprep.subr.mxu0 0.0
    %364 = vmatpush1.msra.mxu0 0.0
    %365 = vmatprep.subr.mxu0 0.0
    %366 = vmatpush1.msra.mxu0 0.0
    %367 = vmatprep.subr.mxu0 0.0
    %368 = vmatpush1.msra.mxu0 0.0
    %369 = vmatprep.subr.mxu0 0.0
    %370 = vmatpush1.msra.mxu0 0.0
    %371 = vmatprep.subr.mxu0 0.0
    %372 = vmatpush1.msra.mxu0 0.0
    %373 = vmatprep.subr.mxu0 0.0
    %374 = vmatpush1.msra.mxu0 0.0
    %375 = vmatprep.subr.mxu0 0.0
    %376 = vmatpush1.msra.mxu0 0.0
    %377 = vmatprep.subr.mxu0 0.0
    %378 = vmatpush1.msra.mxu0 0.0
    %379 = vmatprep.subr.mxu0 0.0
    %380 = vmatpush1.msra.mxu0 0.0
    %381 = vmatprep.subr.mxu0 0.0
    %382 = vmatpush1.msra.mxu0 0.0
    %383 = vmatprep.subr.mxu0 0.0
    %384 = vmatpush1.msra.mxu0 0.0
    %385 = vmatprep.subr.mxu0 0.0
    %386 = vmatpush1.msra.mxu0 0.0
    %387 = vmatprep.subr.mxu0 0.0
    %388 = vmatpush1.msra.mxu0 0.0
    %389 = vmatprep.subr.mxu0 0.0
    %390 = vmatpush1.msra.mxu0 0.0
    %391 = vmatprep.mubr.f32.mxu0 0.0
    %392 = vmatmul.mubr.f32.gmra.mrb[0].mxu0 %v325
    %v393 = vpop.f32.mrb[0].mxu0
    %v394 = vadd.f32 0.0, %v393
    %v395 = vpop.f32.mrb[0].mxu0
    %396 = vdwg.mxu0
    %v397 = vld [vmem:[%s5] sm:$0x1]
    %v398 = vld [vmem:[%s6] sm:$0x1]
    %v400 = vlaneseq
    %v401 = vshrl.u32 %v400, 7
    %v402 = vsub.s32 0, %v401
    %v403 = vrot.slane %v397, %v402
    %v405 = vmul.f32 %v319, %v403
    %406 = vst [vmem:[#allocation11] sm:$0x3] %v405
    %v408 = vlaneseq
    %v409 = vshrl.u32 %v408, 7
    %v410 = vsub.s32 0, %v409
    %v411 = vrot.slane %v398, %v410
    %v413 = vmul.f32 %v319, %v411
    %v414 = vadd.f32 %v413, %v394
    %415 = vst [vmem:[#allocation12] sm:$0x3] %v414
    // Predicated region
    $region50: #{tpu_custom_call.1} parent=1 // pred_check
      _
    $region51: #{tpu_custom_call.1} parent=1 // pred_check_branch
      %417 = sbr.rel (0) target = $region53
    $region52: #{tpu_custom_call.1} parent=1 // pred_region
      %s419 = ssub.s32 32, 32
      %420 = vsyncadd [#allocation4], %s419
      %s422 = sshll.u32 [#allocation11], 4
      %s423 = int_to_ptr.vmem [resolvable:$true] %s422
      %425 = dma.vmem_to_hbm [thread:$0]  %s423, 32, %s7, [#allocation4]
    $region53: #{tpu_custom_call.1} parent=1 // pred_fallthru
      _
    // Predicated region
    $region54: #{tpu_custom_call.1} parent=1 // pred_check
      _
    $region55: #{tpu_custom_call.1} parent=1 // pred_check_branch
      %427 = sbr.rel (0) target = $region57
    $region56: #{tpu_custom_call.1} parent=1 // pred_region
      %s429 = ssub.s32 32, 32
      %430 = vsyncadd [#allocation13], %s429
      %s432 = sshll.u32 [#allocation12], 4
      %s433 = int_to_ptr.vmem [resolvable:$true] %s432
      %435 = dma.vmem_to_hbm [thread:$0]  %s433, 32, %s8, [#allocation13]
    $region57: #{tpu_custom_call.1} parent=1 // pred_fallthru
      _
    // Predicated region
    $region58: #{tpu_custom_call.1} parent=1 // pred_check
      _
    $region59: #{tpu_custom_call.1} parent=1 // pred_check_branch
      %437 = sbr.rel (0) target = $region61
    $region60: #{tpu_custom_call.1} parent=1 // pred_region
      %438 = dma.done [#allocation4], 32
    $region61: #{tpu_custom_call.1} parent=1 // pred_fallthru
      _
    // Predicated region
    $region62: #{tpu_custom_call.1} parent=1 // pred_check
      _
    $region63: #{tpu_custom_call.1} parent=1 // pred_check_branch
      %440 = sbr.rel (0) target = $region65
    $region64: #{tpu_custom_call.1} parent=1 // pred_region
      %441 = dma.done [#allocation13], 32
    $region65: #{tpu_custom_call.1} parent=1 // pred_fallthru
      _
    %442 = vsyncpa [#allocation3], 1
    %443 = vsyncpa [#allocation6], 1
    %444 = vsyncpa [#allocation9], 1
    %445 = vsyncpa [#allocation4], 1
    %446 = vsyncpa [#allocation13], 1

</llo_original>
